<compile_context>
chip_gen: v7x
topology: tpu7x:2x2x1
jax: 0.10.0
libtpu: 0.0.40
codegen_flags: <defaults>
</compile_context>

<pallas_src>
import jax
import jax.numpy as jnp
from jax.experimental import pallas as pl
from jax.experimental.pallas import tpu as pltpu

_LANE = 128
_SUBLANE = 8
# Stay under the smallest default scoped-VMEM limit (v5e: 16 MiB) with margin.
_VMEM_BUDGET = 12 * 1024 * 1024


def _round_up(n, m):
    return ((n + m - 1) // m) * m


def _cdiv(a, b):
    return (a + b - 1) // b


def _ff_pca_kernel(x_ref, w1t_ref, w2t_ref, vec_ref, o_ref):
    """One batch tile; the batch lives on the lane axis throughout.

    x_ref   : (tb, 38)       input rows (mxu dtype)
    w1t_ref : (h8, 38)       fc1 weight, transposed, H zero-padded to h8
    w2t_ref : (h8, h8)       fc2 weight, transposed, zero-padded
    vec_ref : (h8, 8)  f32   col0=b1, col1=b2, col2=fc3 weight, [0,3]=fc3 bias
    o_ref   : (1, 1, tb)     lane-dense output tile
    """
    x = x_ref[...]
    w1t = w1t_ref[...]
    w2t = w2t_ref[...]
    b1c = vec_ref[:, 0:1]          # (h8, 1) f32
    b2c = vec_ref[:, 1:2]
    w3c = vec_ref[:, 2:3]
    b3 = vec_ref[0:1, 3:4]         # (1, 1)  f32

    prec = (jax.lax.Precision.HIGHEST if x.dtype == jnp.float32
            else jax.lax.Precision.DEFAULT)

    # fc1: (h8, F) . (tb, F)^T -> (h8, tb).  A.B^T contraction, MXU-native.
    h1 = jax.lax.dot_general(
        w1t, x, (((1,), (1,)), ((), ())),
        precision=prec, preferred_element_type=jnp.float32)
    h1 = jnp.maximum(h1 + b1c, 0.0)        # relu1; dropout1 = identity (eval)

    # fc2: (h8, h8) . (h8, tb) -> (h8, tb).
    h2 = jnp.dot(w2t, h1.astype(w2t.dtype),
                 precision=prec, preferred_element_type=jnp.float32)
    h2 = jnp.maximum(h2 + b2c, 0.0)        # relu2; dropout2 = identity (eval)

    # fc3 (out_features = 1): VPU multiply + sublane reduce -> lane-dense (1, tb).
    out = jnp.sum(h2 * w3c, axis=0, keepdims=True) + b3
    o_ref[...] = out[None].astype(o_ref.dtype)


def _vmem_estimate(tb, h8, in_features, mxu_bytes):
    lp = lambda n: _round_up(max(n, 1), _LANE)
    est = 0
    est += 2 * tb * lp(in_features) * mxu_bytes      # x tile (double-buffered)
    est += 2 * h8 * lp(in_features) * mxu_bytes      # W1^T
    est += 2 * h8 * lp(h8) * mxu_bytes               # W2^T
    est += 2 * h8 * _LANE * 4                        # bias / w3 columns
    est += 3 * h8 * lp(tb) * 4                       # h1 / h2 / products (f32)
    est += 2 * _SUBLANE * lp(tb) * 4                 # output tile
    return est


def _pick_tiling(batch, hidden, in_features, block_b, mxu_bytes):
    h8 = _round_up(max(hidden, 1), _SUBLANE)
    tb = min(_round_up(batch, _SUBLANE),
             max(_SUBLANE, _round_up(block_b, _SUBLANE)))
    # v7x has 2 TensorCores: keep >= 2 "parallel" tiles for large batches.
    if batch >= 1024 and _cdiv(batch, tb) == 1:
        tb = _round_up(_cdiv(batch, 2), _SUBLANE)
    # Back the tile off if the footprint would blow the default scoped VMEM.
    while tb > 256 and _vmem_estimate(tb, h8, in_features, mxu_bytes) > _VMEM_BUDGET:
        tb = _round_up(tb // 2, _SUBLANE)
    if tb >= batch:
        tb = batch                 # single full block: no padded rows at all
    est = _vmem_estimate(tb, h8, in_features, mxu_bytes)
    vmem_limit = None
    if est > _VMEM_BUDGET:
        # Weight-dominated (large H): raise the scoped limit instead of
        # shrinking further; stay under v7x's 64 MiB physical VMEM.
        vmem_limit = min(int(est * 1.25), 56 * 1024 * 1024)
    return tb, h8, vmem_limit


def ff_pca_forward(x, w1, b1, w2, b2, w3, b3, *, block_b=2048,
                   mxu_dtype=jnp.float32):
    """ff_pca forward (eval mode).  Weights are stored [in, out]:
       x:[B,38], w1:[38,H], b1:[H], w2:[H,H], b2:[H], w3:[H,1], b3:[1]."""
    batch, in_features = x.shape
    hidden = w1.shape[1]
    assert batch >= 1
    assert w1.shape == (in_features, hidden)
    assert w2.shape == (hidden, hidden)
    assert w3.shape == (hidden, 1)

    mxu_bytes = 2 if mxu_dtype == jnp.bfloat16 else 4
    tb, h8, vmem_limit = _pick_tiling(batch, hidden, in_features, block_b,
                                      mxu_bytes)
    n_tiles = _cdiv(batch, tb)

    # --- pack parameters (tiny; folds/fuses under jit) -----------------------
    w1t = jnp.zeros((h8, in_features), mxu_dtype)
    w1t = w1t.at[:hidden, :].set(w1.T.astype(mxu_dtype))
    w2t = jnp.zeros((h8, h8), mxu_dtype)
    w2t = w2t.at[:hidden, :hidden].set(w2.T.astype(mxu_dtype))
    vec = jnp.zeros((h8, 8), jnp.float32)
    vec = vec.at[:hidden, 0].set(b1.reshape(hidden).astype(jnp.float32))
    vec = vec.at[:hidden, 1].set(b2.reshape(hidden).astype(jnp.float32))
    vec = vec.at[:hidden, 2].set(w3.reshape(hidden).astype(jnp.float32))
    vec = vec.at[0, 3].set(jnp.asarray(b3, jnp.float32).reshape(()))

    # x streams straight into the kernel -- no padded copy.  (The optional
    # bf16 cast halves its per-step DMA instead.)
    x_in = x if x.dtype == mxu_dtype else x.astype(mxu_dtype)

    out = pl.pallas_call(
        _ff_pca_kernel,
        out_shape=jax.ShapeDtypeStruct((n_tiles, 1, tb), jnp.float32),
        grid=(n_tiles,),
        in_specs=[
            pl.BlockSpec((tb, in_features), lambda i: (i, 0)),   # x tile
            pl.BlockSpec((h8, in_features), lambda i: (0, 0)),   # W1^T
            pl.BlockSpec((h8, h8), lambda i: (0, 0)),            # W2^T
            pl.BlockSpec((h8, 8), lambda i: (0, 0)),             # b1|b2|w3|b3
        ],
        out_specs=pl.BlockSpec((1, 1, tb), lambda i: (i, 0, 0)),
        compiler_params=pltpu.CompilerParams(
            dimension_semantics=("parallel",),
            vmem_limit_bytes=vmem_limit),
    )(x_in, w1t, w2t, vec)

    # (n_tiles, 1, tb) -> (B, 1): contiguous reshape; ragged-tail lanes dropped.
    return out.reshape(n_tiles * tb)[:batch].reshape(batch, 1)


def init_params(key, hidden_size, in_features=38, dtype=jnp.float32):
    """nn.Linear-style init: U(-1/sqrt(fan_in), +1/sqrt(fan_in))."""
    def linear(k, fan_in, fan_out):
        kw, kb = jax.random.split(k)
        bound = float(1.0 / (fan_in ** 0.5))
        w = jax.random.uniform(kw, (fan_in, fan_out), dtype, -bound, bound)
        b = jax.random.uniform(kb, (fan_out,), dtype, -bound, bound)
        return w, b

    k1, k2, k3 = jax.random.split(key, 3)
    w1, b1 = linear(k1, in_features, hidden_size)
    w2, b2 = linear(k2, hidden_size, hidden_size)
    w3, b3 = linear(k3, hidden_size, 1)
    return w1, b1, w2, b2, w3, b3


def reference_forward(x, w1, b1, w2, b2, w3, b3):
    hp = jax.lax.Precision.HIGHEST
    h1 = jnp.maximum(jnp.dot(x, w1, precision=hp) + b1, 0.0)
    h2 = jnp.maximum(jnp.dot(h1, w2, precision=hp) + b2, 0.0)
    return jnp.dot(h2, w3, precision=hp) + b3


if __name__ == "__main__":
    key = jax.random.PRNGKey(0)
    k_x, k_p = jax.random.split(key)

    in_features = 38
    hidden_size = 32
    params = init_params(k_p, hidden_size, in_features)

    def check(batch, block_b, mxu_dtype, atol, rtol, name):
        xb = jax.random.normal(jax.random.fold_in(k_x, batch),
                               (batch, in_features), jnp.float32)
        out = jax.block_until_ready(
            ff_pca_forward(xb, *params, block_b=block_b, mxu_dtype=mxu_dtype))
        ref = reference_forward(xb, *params)
        assert out.shape == (batch, 1), (name, out.shape)
        err = float(jnp.max(jnp.abs(out - ref)))
        assert jnp.allclose(out, ref, atol=atol, rtol=rtol), (name, err)

    # Single-tile path (one (8, 38) x block).
    check(8, 2048, jnp.float32, 1e-4, 1e-4, "single_tile")
    # Multi-tile "parallel" grid: 3 tiles of 8 rows.
    check(24, 8, jnp.float32, 1e-4, 1e-4, "multi_tile")
    # Ragged batch tail: grid = cdiv(13, 8) = 2, last block partially OOB.
    check(13, 8, jnp.float32, 1e-4, 1e-4, "ragged_tail")
    # bf16 MXU operands (v5e/v6e/v7x fast path); elementwise math stays f32.
    check(16, 2048, jnp.bfloat16, 1e-1, 5e-2, "bf16_mxu")

    print("KERNEL_OK")
</pallas_src>

<mosaic_0001>
module attributes {stable_mosaic.version = 11 : i64} {
  func.func @_ff_pca_kernel(%arg0: i32, %arg1: memref<8x38xf32, #tpu.memory_space<vmem>>, %arg2: memref<32x38xf32, #tpu.memory_space<vmem>>, %arg3: memref<32x32xf32, #tpu.memory_space<vmem>>, %arg4: memref<32x8xf32, #tpu.memory_space<vmem>>, %arg5: memref<1x1x8xf32, #tpu.memory_space<vmem>>) attributes {dimension_semantics = [#tpu.dimension_semantics<parallel>], iteration_bounds = array<i64: 1>, scalar_prefetch = 0 : i64, scratch_operands = 0 : i64, tpu.core_type = #tpu.core_type<tc>, window_params = [{transform_indices = @transform_0, window_bounds = array<i64: 8, 38>}, {pipeline_mode = #tpu.pipeline_mode<synchronous>, transform_indices = @transform_1, window_bounds = array<i64: 32, 38>}, {pipeline_mode = #tpu.pipeline_mode<synchronous>, transform_indices = @transform_2, window_bounds = array<i64: 32, 32>}, {pipeline_mode = #tpu.pipeline_mode<synchronous>, transform_indices = @transform_3, window_bounds = array<i64: 32, 8>}, {transform_indices = @transform_4, window_bounds = array<i64: 1, 1, 8>}]} {
    %c0 = arith.constant 0 : index
    %c0_0 = arith.constant 0 : index
    %0 = vector.load %arg1[%c0, %c0_0] : memref<8x38xf32, #tpu.memory_space<vmem>>, vector<8x38xf32>
    %c0_1 = arith.constant 0 : index
    %c0_2 = arith.constant 0 : index
    %1 = vector.load %arg2[%c0_1, %c0_2] : memref<32x38xf32, #tpu.memory_space<vmem>>, vector<32x38xf32>
    %c0_3 = arith.constant 0 : index
    %c0_4 = arith.constant 0 : index
    %2 = vector.load %arg3[%c0_3, %c0_4] : memref<32x32xf32, #tpu.memory_space<vmem>>, vector<32x32xf32>
    %c0_5 = arith.constant 0 : index
    %c0_6 = arith.constant 0 : index
    %3 = vector.load %arg4[%c0_5, %c0_6] : memref<32x8xf32, #tpu.memory_space<vmem>>, vector<32x1xf32>
    %c0_7 = arith.constant 0 : index
    %c1 = arith.constant 1 : index
    %4 = vector.load %arg4[%c0_7, %c1] : memref<32x8xf32, #tpu.memory_space<vmem>>, vector<32x1xf32>
    %c0_8 = arith.constant 0 : index
    %c2 = arith.constant 2 : index
    %5 = vector.load %arg4[%c0_8, %c2] : memref<32x8xf32, #tpu.memory_space<vmem>>, vector<32x1xf32>
    %c0_9 = arith.constant 0 : index
    %c3 = arith.constant 3 : index
    %6 = vector.load %arg4[%c0_9, %c3] : memref<32x8xf32, #tpu.memory_space<vmem>>, vector<1x1xf32>
    %cst = arith.constant dense<0.000000e+00> : vector<32x8xf32>
    %7 = tpu.matmul %1, %0, %cst {dimension_numbers = #tpu.dot_dimension_numbers<[1], [1], [0], [0], [0, 0, 1, 0], [], []>, precision = #tpu.contract_precision<fp32>} : vector<32x38xf32>, vector<8x38xf32>, vector<32x8xf32> -> vector<32x8xf32>
    %8 = vector.broadcast %3 : vector<32x1xf32> to vector<32x8xf32>
    %9 = arith.addf %7, %8 : vector<32x8xf32>
    %cst_10 = arith.constant 0.000000e+00 : f32
    %10 = vector.broadcast %cst_10 : f32 to vector<32x8xf32>
    %11 = arith.maximumf %9, %10 : vector<32x8xf32>
    %cst_11 = arith.constant dense<0.000000e+00> : vector<32x8xf32>
    %12 = tpu.matmul %2, %11, %cst_11 {dimension_numbers = #tpu.dot_dimension_numbers<[1], [0], [0], [1], [0, 0, 1, 1], [], []>, precision = #tpu.contract_precision<fp32>} : vector<32x32xf32>, vector<32x8xf32>, vector<32x8xf32> -> vector<32x8xf32>
    %13 = vector.broadcast %4 : vector<32x1xf32> to vector<32x8xf32>
    %14 = arith.addf %12, %13 : vector<32x8xf32>
    %cst_12 = arith.constant 0.000000e+00 : f32
    %15 = vector.broadcast %cst_12 : f32 to vector<32x8xf32>
    %16 = arith.maximumf %14, %15 : vector<32x8xf32>
    %17 = vector.broadcast %5 : vector<32x1xf32> to vector<32x8xf32>
    %18 = arith.mulf %16, %17 : vector<32x8xf32>
    %cst_13 = arith.constant dense<0.000000e+00> : vector<8xf32>
    %19 = vector.multi_reduction <add>, %18, %cst_13 [0] : vector<32x8xf32> to vector<8xf32>
    %20 = vector.shape_cast %19 : vector<8xf32> to vector<1x8xf32>
    %21 = vector.broadcast %6 : vector<1x1xf32> to vector<1x8xf32>
    %22 = arith.addf %20, %21 : vector<1x8xf32>
    %23 = vector.shape_cast %22 : vector<1x8xf32> to vector<1x1x8xf32>
    %c0_14 = arith.constant 0 : index
    %c0_15 = arith.constant 0 : index
    %c0_16 = arith.constant 0 : index
    %24 = vector.load %arg5[%c0_14, %c0_15, %c0_16] : memref<1x1x8xf32, #tpu.memory_space<vmem>>, vector<1x1x8xf32>
    tpu.vector_store %arg5[%c0_14, %c0_15, %c0_16], %23 {strides = array<i32>} : memref<1x1x8xf32, #tpu.memory_space<vmem>>, vector<1x1x8xf32>,
    return
  }
  func.func @transform_0(%arg0: i32) -> (i32, i32) {
    %c0_i32 = arith.constant 0 : i32
    %c0_i32_0 = arith.constant 0 : i32
    return %arg0, %c0_i32 : i32, i32
  }
  func.func @transform_1(%arg0: i32) -> (i32, i32) {
    %c0_i32 = arith.constant 0 : i32
    %c0_i32_0 = arith.constant 0 : i32
    %c0_i32_1 = arith.constant 0 : i32
    return %c0_i32, %c0_i32_0 : i32, i32
  }
  func.func @transform_2(%arg0: i32) -> (i32, i32) {
    %c0_i32 = arith.constant 0 : i32
    %c0_i32_0 = arith.constant 0 : i32
    %c0_i32_1 = arith.constant 0 : i32
    return %c0_i32, %c0_i32_0 : i32, i32
  }
  func.func @transform_3(%arg0: i32) -> (i32, i32) {
    %c0_i32 = arith.constant 0 : i32
    %c0_i32_0 = arith.constant 0 : i32
    %c0_i32_1 = arith.constant 0 : i32
    return %c0_i32, %c0_i32_0 : i32, i32
  }
  func.func @transform_4(%arg0: i32) -> (i32, i32, i32) {
    %c0_i32 = arith.constant 0 : i32
    %c0_i32_0 = arith.constant 0 : i32
    %c0_i32_1 = arith.constant 0 : i32
    return %arg0, %c0_i32, %c0_i32_0 : i32, i32, i32
  }
}

</mosaic_0001>

<llo_original>
// kernel: tpu_custom_call.1
$region0: #{tpu_custom_call.1}
  #allocation0 [shape = 'u32[]', space=smem, size = 0x4, offset = 0x4, fixed_abs, tag = 'smem constant byte address 0x4 - core index']
  #allocation1 [shape = 'u32[144,128]{1,0:T(1,128)}', space=vmem, size = 0x12000, scoped, tag = 'internal scratch']
  %s0 = inlined_call_operand.vmem [shape: f32[8,38], index: 0, kind: input, shape index: {}]
  %s1 = inlined_call_operand.vmem [shape: f32[32,38], index: 1, kind: input, shape index: {}]
  %s2 = inlined_call_operand.hbm [shape: f32[32,32], index: 2, kind: input, shape index: {}]
  %s3 = inlined_call_operand.vmem [shape: f32[32,8], index: 3, kind: input, shape index: {}]
  %s4 = inlined_call_operand.hbm [shape: f32[1,1,8], index: 4, kind: output, shape index: {}]
  %s5 = sld [smem:[#allocation0]]
  $region30: #{tpu_custom_call.1} parent=0
    _
  %s7 = ssub.s32 1, %s5
  %s8 = scalar_select 0, %s7, %s5
  $region1: #{tpu_custom_call.1} parent=0
    #allocation2 [shape = 'u8[16384]{0}', space=vmem, size = 0x4000, scoped, tag = 'input window, operand 2, single buffered']
    #allocation3 [shape = 's32[1]{0}', space=sflag, size = 0x4, scoped, tag = 'scoped memory for tpu_custom_call.1']
    #allocation4 [shape = 's32[1]{0}', space=sflag, size = 0x4, scoped, tag = 'scoped memory for tpu_custom_call.1']
    #allocation5 [shape = 'u8[512]{0}', space=vmem, size = 0x400, scoped, tag = 'output window, operand 0, single buffered']
    %9 = vsyncpa [#allocation3], 0
    %10 = vsyncpa [#allocation4], 0
    // Predicated region
    $region2: #{tpu_custom_call.1} parent=1 // pred_check
      _
    $region3: #{tpu_custom_call.1} parent=1 // pred_check_branch
      %12 = sbr.rel (0) target = $region5
    $region4: #{tpu_custom_call.1} parent=1 // pred_region
      _
    $region5: #{tpu_custom_call.1} parent=1 // pred_fallthru
      _
    // Predicated region
    $region6: #{tpu_custom_call.1} parent=1 // pred_check
      _
    $region7: #{tpu_custom_call.1} parent=1 // pred_check_branch
      %14 = sbr.rel (0) target = $region9
    $region8: #{tpu_custom_call.1} parent=1 // pred_region
      _
    $region9: #{tpu_custom_call.1} parent=1 // pred_fallthru
      _
    // Predicated region
    $region10: #{tpu_custom_call.1} parent=1 // pred_check
      _
    $region11: #{tpu_custom_call.1} parent=1 // pred_check_branch
      %16 = sbr.rel (0) target = $region13
    $region12: #{tpu_custom_call.1} parent=1 // pred_region
      %s18 = ssub.s32 512, 512
      %19 = vsyncadd [#allocation3], %s18
      %s20 = sshll.u32 [#allocation2], 4
      %s21 = int_to_ptr.vmem [resolvable:$true] %s20
      %26 = dma.hbm_to_vmem [thread:$0]  %s2, 512, %s21, [#allocation3], 128, 128, 8
    $region13: #{tpu_custom_call.1} parent=1 // pred_fallthru
      _
    // Predicated region
    $region14: #{tpu_custom_call.1} parent=1 // pred_check
      _
    $region15: #{tpu_custom_call.1} parent=1 // pred_check_branch
      %28 = sbr.rel (0) target = $region17
    $region16: #{tpu_custom_call.1} parent=1 // pred_region
      _
    $region17: #{tpu_custom_call.1} parent=1 // pred_fallthru
      _
    // Predicated region
    $region18: #{tpu_custom_call.1} parent=1 // pred_check
      _
    $region19: #{tpu_custom_call.1} parent=1 // pred_check_branch
      %30 = sbr.rel (0) target = $region21
    $region20: #{tpu_custom_call.1} parent=1 // pred_region
      %31 = dma.done [#allocation3], 512
    $region21: #{tpu_custom_call.1} parent=1 // pred_fallthru
      _
    %v32 = vld [vmem:[%s0] sm:$0xff]
    %v33 = vld [vmem:[%s1] sm:$0xff]
    %v34 = vld [vmem:[%s1 + $0x8] sm:$0xff]
    %v35 = vld [vmem:[%s1 + $0x10] sm:$0xff]
    %v36 = vld [vmem:[%s1 + $0x18] sm:$0xff]
    %v37 = vld [vmem:[#allocation2] sm:$0xff]
    %v38 = vld [vmem:[#allocation2 + $0x8] sm:$0xff]
    %v39 = vld [vmem:[#allocation2 + $0x10] sm:$0xff]
    %v40 = vld [vmem:[#allocation2 + $0x18] sm:$0xff]
    %v41 = vld [vmem:[%s3] sm:$0xff]
    %v42 = vld [vmem:[%s3 + $0x8] sm:$0xff]
    %v43 = vld [vmem:[%s3 + $0x10] sm:$0xff]
    %v44 = vld [vmem:[%s3 + $0x18] sm:$0xff]
    %v45 = vld [vmem:[%s3] sm:$0x1]
    %47 = vset.pattern.permute.xlu0 0
    %48 = vperm.xlu0 %47, %v41
    %v49 = vpop.permute.xlu0 %48
    %52 = vset.pattern.permute.xlu0 0
    %53 = vperm.xlu0 %52, %v42
    %v54 = vpop.permute.xlu0 %53
    %57 = vset.pattern.permute.xlu0 0
    %58 = vperm.xlu0 %57, %v43
    %v59 = vpop.permute.xlu0 %58
    %62 = vset.pattern.permute.xlu0 0
    %63 = vperm.xlu0 %62, %v44
    %v64 = vpop.permute.xlu0 %63
    %vm66 = vcmask 310272
    %v68 = vsel %vm66, %v33, 0
    %v71 = vsel %vm66, %v34, 0
    %v74 = vsel %vm66, %v35, 0
    %v77 = vsel %vm66, %v36, 0
    %v80 = vsel %vm66, %v32, 0
    %82 = vmatprep.subr.mxu0 0.0
    %v83 = vand.u32 %v80, 4294901760
    %84 = vmatpush1.xpose.msra.mxu0 %v83
    %85 = vmatprep.subr.mxu0 0.0
    %86 = vmatpush1.xpose.msra.mxu0 0.0
    %87 = vmatprep.subr.mxu0 0.0
    %88 = vmatpush1.xpose.msra.mxu0 0.0
    %89 = vmatprep.subr.mxu0 0.0
    %90 = vmatpush1.xpose.msra.mxu0 0.0
    %91 = vmatprep.subr.mxu0 0.0
    %92 = vmatpush1.xpose.msra.mxu0 0.0
    %93 = vmatprep.subr.mxu0 0.0
    %94 = vmatpush1.xpose.msra.mxu0 0.0
    %95 = vmatprep.subr.mxu0 0.0
    %96 = vmatpush1.xpose.msra.mxu0 0.0
    %97 = vmatprep.subr.mxu0 0.0
    %98 = vmatpush1.xpose.msra.mxu0 0.0
    %99 = vmatprep.subr.mxu0 0.0
    %100 = vmatpush1.xpose.msra.mxu0 0.0
    %101 = vmatprep.subr.mxu0 0.0
    %102 = vmatpush1.xpose.msra.mxu0 0.0
    %103 = vmatprep.subr.mxu0 0.0
    %104 = vmatpush1.xpose.msra.mxu0 0.0
    %105 = vmatprep.subr.mxu0 0.0
    %106 = vmatpush1.xpose.msra.mxu0 0.0
    %107 = vmatprep.subr.mxu0 0.0
    %108 = vmatpush1.xpose.msra.mxu0 0.0
    %109 = vmatprep.subr.mxu0 0.0
    %110 = vmatpush1.xpose.msra.mxu0 0.0
    %111 = vmatprep.subr.mxu0 0.0
    %112 = vmatpush1.xpose.msra.mxu0 0.0
    %113 = vmatprep.subr.mxu0 0.0
    %114 = vmatpush1.xpose.msra.mxu0 0.0
    %115 = vmatprep.subr.mxu0 0.0
    %116 = vmatpush1.xpose.msra.mxu0 0.0
    %117 = vmatprep.subr.mxu0 0.0
    %118 = vmatpush1.xpose.msra.mxu0 0.0
    %119 = vmatprep.subr.mxu0 0.0
    %120 = vmatpush1.xpose.msra.mxu0 0.0
    %121 = vmatprep.subr.mxu0 0.0
    %122 = vmatpush1.xpose.msra.mxu0 0.0
    %123 = vmatprep.subr.mxu0 0.0
    %124 = vmatpush1.xpose.msra.mxu0 0.0
    %125 = vmatprep.subr.mxu0 0.0
    %126 = vmatpush1.xpose.msra.mxu0 0.0
    %127 = vmatprep.subr.mxu0 0.0
    %128 = vmatpush1.xpose.msra.mxu0 0.0
    %129 = vmatprep.subr.mxu0 0.0
    %130 = vmatpush1.xpose.msra.mxu0 0.0
    %131 = vmatprep.subr.mxu0 0.0
    %132 = vmatpush1.xpose.msra.mxu0 0.0
    %133 = vmatprep.subr.mxu0 0.0
    %134 = vmatpush1.xpose.msra.mxu0 0.0
    %135 = vmatprep.subr.mxu0 0.0
    %136 = vmatpush1.xpose.msra.mxu0 0.0
    %137 = vmatprep.subr.mxu0 0.0
    %138 = vmatpush1.xpose.msra.mxu0 0.0
    %139 = vmatprep.subr.mxu0 0.0
    %140 = vmatpush1.xpose.msra.mxu0 0.0
    %141 = vmatprep.subr.mxu0 0.0
    %142 = vmatpush1.xpose.msra.mxu0 0.0
    %143 = vmatprep.subr.mxu0 0.0
    %144 = vmatpush1.xpose.msra.mxu0 0.0
    %145 = vmatprep.subr.mxu0 0.0
    %146 = vmatpush1.xpose.msra.mxu0 0.0
    %147 = vmatprep.mubr.f32.mxu0 0.0
    %v148 = vand.u32 %v68, 4294901760
    %v149 = vsub.f32 %v68, %v148
    %v150 = vand.u32 %v149, 4294901760
    %v151 = vsub.f32 %v149, %v150
    %v152 = vand.u32 %v151, 4294901760
    %153 = vmatmul.mubr.f32.gmra.mrb[0].mxu0 %v152
    %v154 = vpop.f32.mrb[0].mxu0
    %v155 = vadd.f32 %v49, %v154
    %v156 = vpop.f32.mrb[0].mxu0
    %157 = vmatprep.mubr.f32.mxu0 0.0
    %v158 = vand.u32 %v71, 4294901760
    %v159 = vsub.f32 %v71, %v158
    %v160 = vand.u32 %v159, 4294901760
    %v161 = vsub.f32 %v159, %v160
    %v162 = vand.u32 %v161, 4294901760
    %163 = vmatmul.mubr.f32.gmra.mrb[0].mxu0 %v162
    %v164 = vpop.f32.mrb[0].mxu0
    %v165 = vadd.f32 %v54, %v164
    %v166 = vpop.f32.mrb[0].mxu0
    %167 = vmatprep.mubr.f32.mxu0 0.0
    %v168 = vand.u32 %v74, 4294901760
    %v169 = vsub.f32 %v74, %v168
    %v170 = vand.u32 %v169, 4294901760
    %v171 = vsub.f32 %v169, %v170
    %v172 = vand.u32 %v171, 4294901760
    %173 = vmatmul.mubr.f32.gmra.mrb[0].mxu0 %v172
    %v174 = vpop.f32.mrb[0].mxu0
    %v175 = vadd.f32 %v59, %v174
    %v176 = vpop.f32.mrb[0].mxu0
    %177 = vmatprep.mubr.f32.mxu0 0.0
    %v178 = vand.u32 %v77, 4294901760
    %v179 = vsub.f32 %v77, %v178
    %v180 = vand.u32 %v179, 4294901760
    %v181 = vsub.f32 %v179, %v180
    %v182 = vand.u32 %v181, 4294901760
    %183 = vmatmul.mubr.f32.gmra.mrb[0].mxu0 %v182
    %v184 = vpop.f32.mrb[0].mxu0
    %v185 = vadd.f32 %v64, %v184
    %v186 = vpop.f32.mrb[0].mxu0
    %187 = vdwg.mxu0
    %188 = vmatprep.subr.mxu0 0.0
    %v189 = vand.u32 %v80, 4294901760
    %v190 = vsub.f32 %v80, %v189
    %v191 = vand.u32 %v190, 4294901760
    %v192 = vsub.f32 %v190, %v191
    %v193 = vand.u32 %v192, 4294901760
    %194 = vmatpush1.xpose.msra.mxu0 %v193
    %195 = vmatprep.subr.mxu0 0.0
    %196 = vmatpush1.xpose.msra.mxu0 0.0
    %197 = vmatprep.subr.mxu0 0.0
    %198 = vmatpush1.xpose.msra.mxu0 0.0
    %199 = vmatprep.subr.mxu0 0.0
    %200 = vmatpush1.xpose.msra.mxu0 0.0
    %201 = vmatprep.subr.mxu0 0.0
    %202 = vmatpush1.xpose.msra.mxu0 0.0
    %203 = vmatprep.subr.mxu0 0.0
    %204 = vmatpush1.xpose.msra.mxu0 0.0
    %205 = vmatprep.subr.mxu0 0.0
    %206 = vmatpush1.xpose.msra.mxu0 0.0
    %207 = vmatprep.subr.mxu0 0.0
    %208 = vmatpush1.xpose.msra.mxu0 0.0
    %209 = vmatprep.subr.mxu0 0.0
    %210 = vmatpush1.xpose.msra.mxu0 0.0
    %211 = vmatprep.subr.mxu0 0.0
    %212 = vmatpush1.xpose.msra.mxu0 0.0
    %213 = vmatprep.subr.mxu0 0.0
    %214 = vmatpush1.xpose.msra.mxu0 0.0
    %215 = vmatprep.subr.mxu0 0.0
    %216 = vmatpush1.xpose.msra.mxu0 0.0
    %217 = vmatprep.subr.mxu0 0.0
    %218 = vmatpush1.xpose.msra.mxu0 0.0
    %219 = vmatprep.subr.mxu0 0.0
    %220 = vmatpush1.xpose.msra.mxu0 0.0
    %221 = vmatprep.subr.mxu0 0.0
    %222 = vmatpush1.xpose.msra.mxu0 0.0
    %223 = vmatprep.subr.mxu0 0.0
    %224 = vmatpush1.xpose.msra.mxu0 0.0
    %225 = vmatprep.subr.mxu0 0.0
    %226 = vmatpush1.xpose.msra.mxu0 0.0
    %227 = vmatprep.subr.mxu0 0.0
    %228 = vmatpush1.xpose.msra.mxu0 0.0
    %229 = vmatprep.subr.mxu0 0.0
    %230 = vmatpush1.xpose.msra.mxu0 0.0
    %231 = vmatprep.subr.mxu0 0.0
    %232 = vmatpush1.xpose.msra.mxu0 0.0
    %233 = vmatprep.subr.mxu0 0.0
    %234 = vmatpush1.xpose.msra.mxu0 0.0
    %235 = vmatprep.subr.mxu0 0.0
    %236 = vmatpush1.xpose.msra.mxu0 0.0
    %237 = vmatprep.subr.mxu0 0.0
    %238 = vmatpush1.xpose.msra.mxu0 0.0
    %239 = vmatprep.subr.mxu0 0.0
    %240 = vmatpush1.xpose.msra.mxu0 0.0
    %241 = vmatprep.subr.mxu0 0.0
    %242 = vmatpush1.xpose.msra.mxu0 0.0
    %243 = vmatprep.subr.mxu0 0.0
    %244 = vmatpush1.xpose.msra.mxu0 0.0
    %245 = vmatprep.subr.mxu0 0.0
    %246 = vmatpush1.xpose.msra.mxu0 0.0
    %247 = vmatprep.subr.mxu0 0.0
    %248 = vmatpush1.xpose.msra.mxu0 0.0
    %249 = vmatprep.subr.mxu0 0.0
    %250 = vmatpush1.xpose.msra.mxu0 0.0
    %251 = vmatprep.subr.mxu0 0.0
    %252 = vmatpush1.xpose.msra.mxu0 0.0
    %253 = vmatprep.subr.mxu0 0.0
    %254 = vmatpush1.xpose.msra.mxu0 0.0
    %255 = vmatprep.subr.mxu0 0.0
    %256 = vmatpush1.xpose.msra.mxu0 0.0
    %257 = vmatprep.mubr.f32.mxu0 0.0
    %v258 = vand.u32 %v68, 4294901760
    %259 = vmatmul.mubr.f32.gmra.mrb[0].mxu0 %v258
    %v260 = vpop.f32.mrb[0].mxu0
    %v261 = vadd.f32 %v155, %v260
    %v262 = vpop.f32.mrb[0].mxu0
    %263 = vmatprep.mubr.f32.mxu0 0.0
    %v264 = vand.u32 %v71, 4294901760
    %265 = vmatmul.mubr.f32.gmra.mrb[0].mxu0 %v264
    %v266 = vpop.f32.mrb[0].mxu0
    %v267 = vadd.f32 %v165, %v266
    %v268 = vpop.f32.mrb[0].mxu0
    %269 = vmatprep.mubr.f32.mxu0 0.0
    %v270 = vand.u32 %v74, 4294901760
    %271 = vmatmul.mubr.f32.gmra.mrb[0].mxu0 %v270
    %v272 = vpop.f32.mrb[0].mxu0
    %v273 = vadd.f32 %v175, %v272
    %v274 = vpop.f32.mrb[0].mxu0
    %275 = vmatprep.mubr.f32.mxu0 0.0
    %v276 = vand.u32 %v77, 4294901760
    %277 = vmatmul.mubr.f32.gmra.mrb[0].mxu0 %v276
    %v278 = vpop.f32.mrb[0].mxu0
    %v279 = vadd.f32 %v185, %v278
    %v280 = vpop.f32.mrb[0].mxu0
    %281 = vdwg.mxu0
    %282 = vmatprep.subr.mxu0 0.0
    %v283 = vand.u32 %v80, 4294901760
    %v284 = vsub.f32 %v80, %v283
    %285 = vmatpush1.xpose.msra.mxu0 %v284
    %286 = vmatprep.subr.mxu0 0.0
    %287 = vmatpush1.xpose.msra.mxu0 0.0
    %288 = vmatprep.subr.mxu0 0.0
    %289 = vmatpush1.xpose.msra.mxu0 0.0
    %290 = vmatprep.subr.mxu0 0.0
    %291 = vmatpush1.xpose.msra.mxu0 0.0
    %292 = vmatprep.subr.mxu0 0.0
    %293 = vmatpush1.xpose.msra.mxu0 0.0
    %294 = vmatprep.subr.mxu0 0.0
    %295 = vmatpush1.xpose.msra.mxu0 0.0
    %296 = vmatprep.subr.mxu0 0.0
    %297 = vmatpush1.xpose.msra.mxu0 0.0
    %298 = vmatprep.subr.mxu0 0.0
    %299 = vmatpush1.xpose.msra.mxu0 0.0
    %300 = vmatprep.subr.mxu0 0.0
    %301 = vmatpush1.xpose.msra.mxu0 0.0
    %302 = vmatprep.subr.mxu0 0.0
    %303 = vmatpush1.xpose.msra.mxu0 0.0
    %304 = vmatprep.subr.mxu0 0.0
    %305 = vmatpush1.xpose.msra.mxu0 0.0
    %306 = vmatprep.subr.mxu0 0.0
    %307 = vmatpush1.xpose.msra.mxu0 0.0
    %308 = vmatprep.subr.mxu0 0.0
    %309 = vmatpush1.xpose.msra.mxu0 0.0
    %310 = vmatprep.subr.mxu0 0.0
    %311 = vmatpush1.xpose.msra.mxu0 0.0
    %312 = vmatprep.subr.mxu0 0.0
    %313 = vmatpush1.xpose.msra.mxu0 0.0
    %314 = vmatprep.subr.mxu0 0.0
    %315 = vmatpush1.xpose.msra.mxu0 0.0
    %316 = vmatprep.subr.mxu0 0.0
    %317 = vmatpush1.xpose.msra.mxu0 0.0
    %318 = vmatprep.subr.mxu0 0.0
    %319 = vmatpush1.xpose.msra.mxu0 0.0
    %320 = vmatprep.subr.mxu0 0.0
    %321 = vmatpush1.xpose.msra.mxu0 0.0
    %322 = vmatprep.subr.mxu0 0.0
    %323 = vmatpush1.xpose.msra.mxu0 0.0
    %324 = vmatprep.subr.mxu0 0.0
    %325 = vmatpush1.xpose.msra.mxu0 0.0
    %326 = vmatprep.subr.mxu0 0.0
    %327 = vmatpush1.xpose.msra.mxu0 0.0
    %328 = vmatprep.subr.mxu0 0.0
    %329 = vmatpush1.xpose.msra.mxu0 0.0
    %330 = vmatprep.subr.mxu0 0.0
    %331 = vmatpush1.xpose.msra.mxu0 0.0
    %332 = vmatprep.subr.mxu0 0.0
    %333 = vmatpush1.xpose.msra.mxu0 0.0
    %334 = vmatprep.subr.mxu0 0.0
    %335 = vmatpush1.xpose.msra.mxu0 0.0
    %336 = vmatprep.subr.mxu0 0.0
    %337 = vmatpush1.xpose.msra.mxu0 0.0
    %338 = vmatprep.subr.mxu0 0.0
    %339 = vmatpush1.xpose.msra.mxu0 0.0
    %340 = vmatprep.subr.mxu0 0.0
    %341 = vmatpush1.xpose.msra.mxu0 0.0
    %342 = vmatprep.subr.mxu0 0.0
    %343 = vmatpush1.xpose.msra.mxu0 0.0
    %344 = vmatprep.subr.mxu0 0.0
    %345 = vmatpush1.xpose.msra.mxu0 0.0
    %346 = vmatprep.subr.mxu0 0.0
    %347 = vmatpush1.xpose.msra.mxu0 0.0
    %348 = vmatprep.mubr.f32.mxu0 0.0
    %v349 = vand.u32 %v68, 4294901760
    %v350 = vsub.f32 %v68, %v349
    %351 = vmatmul.mubr.f32.gmra.mrb[0].mxu0 %v350
    %v352 = vpop.f32.mrb[0].mxu0
    %v353 = vadd.f32 %v261, %v352
    %v354 = vpop.f32.mrb[0].mxu0
    %355 = vmatprep.mubr.f32.mxu0 0.0
    %v356 = vand.u32 %v71, 4294901760
    %v357 = vsub.f32 %v71, %v356
    %358 = vmatmul.mubr.f32.gmra.mrb[0].mxu0 %v357
    %v359 = vpop.f32.mrb[0].mxu0
    %v360 = vadd.f32 %v267, %v359
    %v361 = vpop.f32.mrb[0].mxu0
    %362 = vmatprep.mubr.f32.mxu0 0.0
    %v363 = vand.u32 %v74, 4294901760
    %v364 = vsub.f32 %v74, %v363
    %365 = vmatmul.mubr.f32.gmra.mrb[0].mxu0 %v364
    %v366 = vpop.f32.mrb[0].mxu0
    %v367 = vadd.f32 %v273, %v366
    %v368 = vpop.f32.mrb[0].mxu0
    %369 = vmatprep.mubr.f32.mxu0 0.0
    %v370 = vand.u32 %v77, 4294901760
    %v371 = vsub.f32 %v77, %v370
    %372 = vmatmul.mubr.f32.gmra.mrb[0].mxu0 %v371
    %v373 = vpop.f32.mrb[0].mxu0
    %v374 = vadd.f32 %v279, %v373
    %v375 = vpop.f32.mrb[0].mxu0
    %376 = vdwg.mxu0
    %377 = vmatprep.subr.mxu0 0.0
    %v378 = vand.u32 %v80, 4294901760
    %379 = vmatpush1.xpose.msra.mxu0 %v378
    %380 = vmatprep.subr.mxu0 0.0
    %381 = vmatpush1.xpose.msra.mxu0 0.0
    %382 = vmatprep.subr.mxu0 0.0
    %383 = vmatpush1.xpose.msra.mxu0 0.0
    %384 = vmatprep.subr.mxu0 0.0
    %385 = vmatpush1.xpose.msra.mxu0 0.0
    %386 = vmatprep.subr.mxu0 0.0
    %387 = vmatpush1.xpose.msra.mxu0 0.0
    %388 = vmatprep.subr.mxu0 0.0
    %389 = vmatpush1.xpose.msra.mxu0 0.0
    %390 = vmatprep.subr.mxu0 0.0
    %391 = vmatpush1.xpose.msra.mxu0 0.0
    %392 = vmatprep.subr.mxu0 0.0
    %393 = vmatpush1.xpose.msra.mxu0 0.0
    %394 = vmatprep.subr.mxu0 0.0
    %395 = vmatpush1.xpose.msra.mxu0 0.0
    %396 = vmatprep.subr.mxu0 0.0
    %397 = vmatpush1.xpose.msra.mxu0 0.0
    %398 = vmatprep.subr.mxu0 0.0
    %399 = vmatpush1.xpose.msra.mxu0 0.0
    %400 = vmatprep.subr.mxu0 0.0
    %401 = vmatpush1.xpose.msra.mxu0 0.0
    %402 = vmatprep.subr.mxu0 0.0
    %403 = vmatpush1.xpose.msra.mxu0 0.0
    %404 = vmatprep.subr.mxu0 0.0
    %405 = vmatpush1.xpose.msra.mxu0 0.0
    %406 = vmatprep.subr.mxu0 0.0
    %407 = vmatpush1.xpose.msra.mxu0 0.0
    %408 = vmatprep.subr.mxu0 0.0
    %409 = vmatpush1.xpose.msra.mxu0 0.0
    %410 = vmatprep.subr.mxu0 0.0
    %411 = vmatpush1.xpose.msra.mxu0 0.0
    %412 = vmatprep.subr.mxu0 0.0
    %413 = vmatpush1.xpose.msra.mxu0 0.0
    %414 = vmatprep.subr.mxu0 0.0
    %415 = vmatpush1.xpose.msra.mxu0 0.0
    %416 = vmatprep.subr.mxu0 0.0
    %417 = vmatpush1.xpose.msra.mxu0 0.0
    %418 = vmatprep.subr.mxu0 0.0
    %419 = vmatpush1.xpose.msra.mxu0 0.0
    %420 = vmatprep.subr.mxu0 0.0
    %421 = vmatpush1.xpose.msra.mxu0 0.0
    %422 = vmatprep.subr.mxu0 0.0
    %423 = vmatpush1.xpose.msra.mxu0 0.0
    %424 = vmatprep.subr.mxu0 0.0
    %425 = vmatpush1.xpose.msra.mxu0 0.0
    %426 = vmatprep.subr.mxu0 0.0
    %427 = vmatpush1.xpose.msra.mxu0 0.0
    %428 = vmatprep.subr.mxu0 0.0
    %429 = vmatpush1.xpose.msra.mxu0 0.0
    %430 = vmatprep.subr.mxu0 0.0
    %431 = vmatpush1.xpose.msra.mxu0 0.0
    %432 = vmatprep.subr.mxu0 0.0
    %433 = vmatpush1.xpose.msra.mxu0 0.0
    %434 = vmatprep.subr.mxu0 0.0
    %435 = vmatpush1.xpose.msra.mxu0 0.0
    %436 = vmatprep.subr.mxu0 0.0
    %437 = vmatpush1.xpose.msra.mxu0 0.0
    %438 = vmatprep.subr.mxu0 0.0
    %439 = vmatpush1.xpose.msra.mxu0 0.0
    %440 = vmatprep.subr.mxu0 0.0
    %441 = vmatpush1.xpose.msra.mxu0 0.0
    %442 = vmatprep.mubr.f32.mxu0 0.0
    %v443 = vand.u32 %v68, 4294901760
    %v444 = vsub.f32 %v68, %v443
    %v445 = vand.u32 %v444, 4294901760
    %446 = vmatmul.mubr.f32.gmra.mrb[0].mxu0 %v445
    %v447 = vpop.f32.mrb[0].mxu0
    %v448 = vadd.f32 %v353, %v447
    %v449 = vpop.f32.mrb[0].mxu0
    %450 = vmatprep.mubr.f32.mxu0 0.0
    %v451 = vand.u32 %v71, 4294901760
    %v452 = vsub.f32 %v71, %v451
    %v453 = vand.u32 %v452, 4294901760
    %454 = vmatmul.mubr.f32.gmra.mrb[0].mxu0 %v453
    %v455 = vpop.f32.mrb[0].mxu0
    %v456 = vadd.f32 %v360, %v455
    %v457 = vpop.f32.mrb[0].mxu0
    %458 = vmatprep.mubr.f32.mxu0 0.0
    %v459 = vand.u32 %v74, 4294901760
    %v460 = vsub.f32 %v74, %v459
    %v461 = vand.u32 %v460, 4294901760
    %462 = vmatmul.mubr.f32.gmra.mrb[0].mxu0 %v461
    %v463 = vpop.f32.mrb[0].mxu0
    %v464 = vadd.f32 %v367, %v463
    %v465 = vpop.f32.mrb[0].mxu0
    %466 = vmatprep.mubr.f32.mxu0 0.0
    %v467 = vand.u32 %v77, 4294901760
    %v468 = vsub.f32 %v77, %v467
    %v469 = vand.u32 %v468, 4294901760
    %470 = vmatmul.mubr.f32.gmra.mrb[0].mxu0 %v469
    %v471 = vpop.f32.mrb[0].mxu0
    %v472 = vadd.f32 %v374, %v471
    %v473 = vpop.f32.mrb[0].mxu0
    %474 = vdwg.mxu0
    %475 = vmatprep.subr.mxu0 0.0
    %v476 = vand.u32 %v80, 4294901760
    %v477 = vsub.f32 %v80, %v476
    %v478 = vand.u32 %v477, 4294901760
    %479 = vmatpush1.xpose.msra.mxu0 %v478
    %480 = vmatprep.subr.mxu0 0.0
    %481 = vmatpush1.xpose.msra.mxu0 0.0
    %482 = vmatprep.subr.mxu0 0.0
    %483 = vmatpush1.xpose.msra.mxu0 0.0
    %484 = vmatprep.subr.mxu0 0.0
    %485 = vmatpush1.xpose.msra.mxu0 0.0
    %486 = vmatprep.subr.mxu0 0.0
    %487 = vmatpush1.xpose.msra.mxu0 0.0
    %488 = vmatprep.subr.mxu0 0.0
    %489 = vmatpush1.xpose.msra.mxu0 0.0
    %490 = vmatprep.subr.mxu0 0.0
    %491 = vmatpush1.xpose.msra.mxu0 0.0
    %492 = vmatprep.subr.mxu0 0.0
    %493 = vmatpush1.xpose.msra.mxu0 0.0
    %494 = vmatprep.subr.mxu0 0.0
    %495 = vmatpush1.xpose.msra.mxu0 0.0
    %496 = vmatprep.subr.mxu0 0.0
    %497 = vmatpush1.xpose.msra.mxu0 0.0
    %498 = vmatprep.subr.mxu0 0.0
    %499 = vmatpush1.xpose.msra.mxu0 0.0
    %500 = vmatprep.subr.mxu0 0.0
    %501 = vmatpush1.xpose.msra.mxu0 0.0
    %502 = vmatprep.subr.mxu0 0.0
    %503 = vmatpush1.xpose.msra.mxu0 0.0
    %504 = vmatprep.subr.mxu0 0.0
    %505 = vmatpush1.xpose.msra.mxu0 0.0
    %506 = vmatprep.subr.mxu0 0.0
    %507 = vmatpush1.xpose.msra.mxu0 0.0
    %508 = vmatprep.subr.mxu0 0.0
    %509 = vmatpush1.xpose.msra.mxu0 0.0
    %510 = vmatprep.subr.mxu0 0.0
    %511 = vmatpush1.xpose.msra.mxu0 0.0
    %512 = vmatprep.subr.mxu0 0.0
    %513 = vmatpush1.xpose.msra.mxu0 0.0
    %514 = vmatprep.subr.mxu0 0.0
    %515 = vmatpush1.xpose.msra.mxu0 0.0
    %516 = vmatprep.subr.mxu0 0.0
    %517 = vmatpush1.xpose.msra.mxu0 0.0
    %518 = vmatprep.subr.mxu0 0.0
    %519 = vmatpush1.xpose.msra.mxu0 0.0
    %520 = vmatprep.subr.mxu0 0.0
    %521 = vmatpush1.xpose.msra.mxu0 0.0
    %522 = vmatprep.subr.mxu0 0.0
    %523 = vmatpush1.xpose.msra.mxu0 0.0
    %524 = vmatprep.subr.mxu0 0.0
    %525 = vmatpush1.xpose.msra.mxu0 0.0
    %526 = vmatprep.subr.mxu0 0.0
    %527 = vmatpush1.xpose.msra.mxu0 0.0
    %528 = vmatprep.subr.mxu0 0.0
    %529 = vmatpush1.xpose.msra.mxu0 0.0
    %530 = vmatprep.subr.mxu0 0.0
    %531 = vmatpush1.xpose.msra.mxu0 0.0
    %532 = vmatprep.subr.mxu0 0.0
    %533 = vmatpush1.xpose.msra.mxu0 0.0
    %534 = vmatprep.subr.mxu0 0.0
    %535 = vmatpush1.xpose.msra.mxu0 0.0
    %536 = vmatprep.subr.mxu0 0.0
    %537 = vmatpush1.xpose.msra.mxu0 0.0
    %538 = vmatprep.subr.mxu0 0.0
    %539 = vmatpush1.xpose.msra.mxu0 0.0
    %540 = vmatprep.subr.mxu0 0.0
    %541 = vmatpush1.xpose.msra.mxu0 0.0
    %542 = vmatprep.mubr.f32.mxu0 0.0
    %v543 = vand.u32 %v68, 4294901760
    %544 = vmatmul.mubr.f32.gmra.mrb[0].mxu0 %v543
    %v545 = vpop.f32.mrb[0].mxu0
    %v546 = vadd.f32 %v448, %v545
    %v547 = vpop.f32.mrb[0].mxu0
    %548 = vmatprep.mubr.f32.mxu0 0.0
    %v549 = vand.u32 %v71, 4294901760
    %550 = vmatmul.mubr.f32.gmra.mrb[0].mxu0 %v549
    %v551 = vpop.f32.mrb[0].mxu0
    %v552 = vadd.f32 %v456, %v551
    %v553 = vpop.f32.mrb[0].mxu0
    %554 = vmatprep.mubr.f32.mxu0 0.0
    %v555 = vand.u32 %v74, 4294901760
    %556 = vmatmul.mubr.f32.gmra.mrb[0].mxu0 %v555
    %v557 = vpop.f32.mrb[0].mxu0
    %v558 = vadd.f32 %v464, %v557
    %v559 = vpop.f32.mrb[0].mxu0
    %560 = vmatprep.mubr.f32.mxu0 0.0
    %v561 = vand.u32 %v77, 4294901760
    %562 = vmatmul.mubr.f32.gmra.mrb[0].mxu0 %v561
    %v563 = vpop.f32.mrb[0].mxu0
    %v564 = vadd.f32 %v472, %v563
    %v565 = vpop.f32.mrb[0].mxu0
    %566 = vdwg.mxu0
    %567 = vmatprep.subr.mxu0 0.0
    %v568 = vand.u32 %v80, 4294901760
    %569 = vmatpush1.xpose.msra.mxu0 %v568
    %570 = vmatprep.subr.mxu0 0.0
    %571 = vmatpush1.xpose.msra.mxu0 0.0
    %572 = vmatprep.subr.mxu0 0.0
    %573 = vmatpush1.xpose.msra.mxu0 0.0
    %574 = vmatprep.subr.mxu0 0.0
    %575 = vmatpush1.xpose.msra.mxu0 0.0
    %576 = vmatprep.subr.mxu0 0.0
    %577 = vmatpush1.xpose.msra.mxu0 0.0
    %578 = vmatprep.subr.mxu0 0.0
    %579 = vmatpush1.xpose.msra.mxu0 0.0
    %580 = vmatprep.subr.mxu0 0.0
    %581 = vmatpush1.xpose.msra.mxu0 0.0
    %582 = vmatprep.subr.mxu0 0.0
    %583 = vmatpush1.xpose.msra.mxu0 0.0
    %584 = vmatprep.subr.mxu0 0.0
    %585 = vmatpush1.xpose.msra.mxu0 0.0
    %586 = vmatprep.subr.mxu0 0.0
    %587 = vmatpush1.xpose.msra.mxu0 0.0
    %588 = vmatprep.subr.mxu0 0.0
    %589 = vmatpush1.xpose.msra.mxu0 0.0
    %590 = vmatprep.subr.mxu0 0.0
    %591 = vmatpush1.xpose.msra.mxu0 0.0
    %592 = vmatprep.subr.mxu0 0.0
    %593 = vmatpush1.xpose.msra.mxu0 0.0
    %594 = vmatprep.subr.mxu0 0.0
    %595 = vmatpush1.xpose.msra.mxu0 0.0
    %596 = vmatprep.subr.mxu0 0.0
    %597 = vmatpush1.xpose.msra.mxu0 0.0
    %598 = vmatprep.subr.mxu0 0.0
    %599 = vmatpush1.xpose.msra.mxu0 0.0
    %600 = vmatprep.subr.mxu0 0.0
    %601 = vmatpush1.xpose.msra.mxu0 0.0
    %602 = vmatprep.subr.mxu0 0.0
    %603 = vmatpush1.xpose.msra.mxu0 0.0
    %604 = vmatprep.subr.mxu0 0.0
    %605 = vmatpush1.xpose.msra.mxu0 0.0
    %606 = vmatprep.subr.mxu0 0.0
    %607 = vmatpush1.xpose.msra.mxu0 0.0
    %608 = vmatprep.subr.mxu0 0.0
    %609 = vmatpush1.xpose.msra.mxu0 0.0
    %610 = vmatprep.subr.mxu0 0.0
    %611 = vmatpush1.xpose.msra.mxu0 0.0
    %612 = vmatprep.subr.mxu0 0.0
    %613 = vmatpush1.xpose.msra.mxu0 0.0
    %614 = vmatprep.subr.mxu0 0.0
    %615 = vmatpush1.xpose.msra.mxu0 0.0
    %616 = vmatprep.subr.mxu0 0.0
    %617 = vmatpush1.xpose.msra.mxu0 0.0
    %618 = vmatprep.subr.mxu0 0.0
    %619 = vmatpush1.xpose.msra.mxu0 0.0
    %620 = vmatprep.subr.mxu0 0.0
    %621 = vmatpush1.xpose.msra.mxu0 0.0
    %622 = vmatprep.subr.mxu0 0.0
    %623 = vmatpush1.xpose.msra.mxu0 0.0
    %624 = vmatprep.subr.mxu0 0.0
    %625 = vmatpush1.xpose.msra.mxu0 0.0
    %626 = vmatprep.subr.mxu0 0.0
    %627 = vmatpush1.xpose.msra.mxu0 0.0
    %628 = vmatprep.subr.mxu0 0.0
    %629 = vmatpush1.xpose.msra.mxu0 0.0
    %630 = vmatprep.subr.mxu0 0.0
    %631 = vmatpush1.xpose.msra.mxu0 0.0
    %632 = vmatprep.mubr.f32.mxu0 0.0
    %v633 = vand.u32 %v68, 4294901760
    %634 = vmatmul.mubr.f32.gmra.mrb[0].mxu0 %v633
    %v635 = vpop.f32.mrb[0].mxu0
    %v636 = vadd.f32 %v546, %v635
    %v637 = vpop.f32.mrb[0].mxu0
    %638 = vmatprep.mubr.f32.mxu0 0.0
    %v639 = vand.u32 %v71, 4294901760
    %640 = vmatmul.mubr.f32.gmra.mrb[0].mxu0 %v639
    %v641 = vpop.f32.mrb[0].mxu0
    %v642 = vadd.f32 %v552, %v641
    %v643 = vpop.f32.mrb[0].mxu0
    %644 = vmatprep.mubr.f32.mxu0 0.0
    %v645 = vand.u32 %v74, 4294901760
    %646 = vmatmul.mubr.f32.gmra.mrb[0].mxu0 %v645
    %v647 = vpop.f32.mrb[0].mxu0
    %v648 = vadd.f32 %v558, %v647
    %v649 = vpop.f32.mrb[0].mxu0
    %650 = vmatprep.mubr.f32.mxu0 0.0
    %v651 = vand.u32 %v77, 4294901760
    %652 = vmatmul.mubr.f32.gmra.mrb[0].mxu0 %v651
    %v653 = vpop.f32.mrb[0].mxu0
    %v654 = vadd.f32 %v564, %v653
    %v655 = vpop.f32.mrb[0].mxu0
    %656 = vdwg.mxu0
    %v657 = vmax.f32 %v636, 0.0
    %v658 = vmax.f32 %v642, 0.0
    %v659 = vmax.f32 %v648, 0.0
    %v660 = vmax.f32 %v654, 0.0
    %661 = vset.pattern.permute.xlu0 1
    %662 = vperm.xlu0 %661, %v41
    %v663 = vpop.permute.xlu0 %662
    %665 = vset.pattern.permute.xlu0 1
    %666 = vperm.xlu0 %665, %v42
    %v667 = vpop.permute.xlu0 %666
    %669 = vset.pattern.permute.xlu0 1
    %670 = vperm.xlu0 %669, %v43
    %v671 = vpop.permute.xlu0 %670
    %673 = vset.pattern.permute.xlu0 1
    %674 = vperm.xlu0 %673, %v44
    %v675 = vpop.permute.xlu0 %674
    %vm677 = vcmask 261120
    %v679 = vsel %vm677, %v37, 0
    %v682 = vsel %vm677, %v38, 0
    %v685 = vsel %vm677, %v39, 0
    %v688 = vsel %vm677, %v40, 0
    %690 = vmatprep.subr.mxu0 0.0
    %v691 = vand.u32 %v657, 4294901760
    %692 = vmatpush1.msra.mxu0 %v691
    %693 = vmatprep.subr.mxu0 0.0
    %v694 = vand.u32 %v658, 4294901760
    %695 = vmatpush1.msra.mxu0 %v694
    %696 = vmatprep.subr.mxu0 0.0
    %v697 = vand.u32 %v659, 4294901760
    %698 = vmatpush1.msra.mxu0 %v697
    %699 = vmatprep.subr.mxu0 0.0
    %v700 = vand.u32 %v660, 4294901760
    %701 = vmatpush1.msra.mxu0 %v700
    %702 = vmatprep.subr.mxu0 0.0
    %703 = vmatpush1.msra.mxu0 0.0
    %704 = vmatprep.subr.mxu0 0.0
    %705 = vmatpush1.msra.mxu0 0.0
    %706 = vmatprep.subr.mxu0 0.0
    %707 = vmatpush1.msra.mxu0 0.0
    %708 = vmatprep.subr.mxu0 0.0
    %709 = vmatpush1.msra.mxu0 0.0
    %710 = vmatprep.subr.mxu0 0.0
    %711 = vmatpush1.msra.mxu0 0.0
    %712 = vmatprep.subr.mxu0 0.0
    %713 = vmatpush1.msra.mxu0 0.0
    %714 = vmatprep.subr.mxu0 0.0
    %715 = vmatpush1.msra.mxu0 0.0
    %716 = vmatprep.subr.mxu0 0.0
    %717 = vmatpush1.msra.mxu0 0.0
    %718 = vmatprep.subr.mxu0 0.0
    %719 = vmatpush1.msra.mxu0 0.0
    %720 = vmatprep.subr.mxu0 0.0
    %721 = vmatpush1.msra.mxu0 0.0
    %722 = vmatprep.subr.mxu0 0.0
    %723 = vmatpush1.msra.mxu0 0.0
    %724 = vmatprep.subr.mxu0 0.0
    %725 = vmatpush1.msra.mxu0 0.0
    %726 = vmatprep.subr.mxu0 0.0
    %727 = vmatpush1.msra.mxu0 0.0
    %728 = vmatprep.subr.mxu0 0.0
    %729 = vmatpush1.msra.mxu0 0.0
    %730 = vmatprep.subr.mxu0 0.0
    %731 = vmatpush1.msra.mxu0 0.0
    %732 = vmatprep.subr.mxu0 0.0
    %733 = vmatpush1.msra.mxu0 0.0
    %734 = vmatprep.subr.mxu0 0.0
    %735 = vmatpush1.msra.mxu0 0.0
    %736 = vmatprep.subr.mxu0 0.0
    %737 = vmatpush1.msra.mxu0 0.0
    %738 = vmatprep.subr.mxu0 0.0
    %739 = vmatpush1.msra.mxu0 0.0
    %740 = vmatprep.subr.mxu0 0.0
    %741 = vmatpush1.msra.mxu0 0.0
    %742 = vmatprep.subr.mxu0 0.0
    %743 = vmatpush1.msra.mxu0 0.0
    %744 = vmatprep.subr.mxu0 0.0
    %745 = vmatpush1.msra.mxu0 0.0
    %746 = vmatprep.subr.mxu0 0.0
    %747 = vmatpush1.msra.mxu0 0.0
    %748 = vmatprep.subr.mxu0 0.0
    %749 = vmatpush1.msra.mxu0 0.0
    %750 = vmatprep.subr.mxu0 0.0
    %751 = vmatpush1.msra.mxu0 0.0
    %752 = vmatprep.subr.mxu0 0.0
    %753 = vmatpush1.msra.mxu0 0.0
    %754 = vmatprep.subr.mxu0 0.0
    %755 = vmatpush1.msra.mxu0 0.0
    %756 = vmatprep.subr.mxu0 0.0
    %757 = vmatpush1.msra.mxu0 0.0
    %758 = vmatprep.mubr.f32.mxu0 0.0
    %v759 = vand.u32 %v679, 4294901760
    %v760 = vsub.f32 %v679, %v759
    %v761 = vand.u32 %v760, 4294901760
    %v762 = vsub.f32 %v760, %v761
    %v763 = vand.u32 %v762, 4294901760
    %764 = vmatmul.mubr.f32.gmra.mrb[0].mxu0 %v763
    %v765 = vpop.f32.mrb[0].mxu0
    %v766 = vadd.f32 %v663, %v765
    %v767 = vpop.f32.mrb[0].mxu0
    %768 = vmatprep.mubr.f32.mxu0 0.0
    %v769 = vand.u32 %v682, 4294901760
    %v770 = vsub.f32 %v682, %v769
    %v771 = vand.u32 %v770, 4294901760
    %v772 = vsub.f32 %v770, %v771
    %v773 = vand.u32 %v772, 4294901760
    %774 = vmatmul.mubr.f32.gmra.mrb[0].mxu0 %v773
    %v775 = vpop.f32.mrb[0].mxu0
    %v776 = vadd.f32 %v667, %v775
    %v777 = vpop.f32.mrb[0].mxu0
    %778 = vmatprep.mubr.f32.mxu0 0.0
    %v779 = vand.u32 %v685, 4294901760
    %v780 = vsub.f32 %v685, %v779
    %v781 = vand.u32 %v780, 4294901760
    %v782 = vsub.f32 %v780, %v781
    %v783 = vand.u32 %v782, 4294901760
    %784 = vmatmul.mubr.f32.gmra.mrb[0].mxu0 %v783
    %v785 = vpop.f32.mrb[0].mxu0
    %v786 = vadd.f32 %v671, %v785
    %v787 = vpop.f32.mrb[0].mxu0
    %788 = vmatprep.mubr.f32.mxu0 0.0
    %v789 = vand.u32 %v688, 4294901760
    %v790 = vsub.f32 %v688, %v789
    %v791 = vand.u32 %v790, 4294901760
    %v792 = vsub.f32 %v790, %v791
    %v793 = vand.u32 %v792, 4294901760
    %794 = vmatmul.mubr.f32.gmra.mrb[0].mxu0 %v793
    %v795 = vpop.f32.mrb[0].mxu0
    %v796 = vadd.f32 %v675, %v795
    %v797 = vpop.f32.mrb[0].mxu0
    %798 = vdwg.mxu0
    %799 = vmatprep.subr.mxu0 0.0
    %v800 = vand.u32 %v657, 4294901760
    %v801 = vsub.f32 %v657, %v800
    %v802 = vand.u32 %v801, 4294901760
    %v803 = vsub.f32 %v801, %v802
    %v804 = vand.u32 %v803, 4294901760
    %805 = vmatpush1.msra.mxu0 %v804
    %806 = vmatprep.subr.mxu0 0.0
    %v807 = vand.u32 %v658, 4294901760
    %v808 = vsub.f32 %v658, %v807
    %v809 = vand.u32 %v808, 4294901760
    %v810 = vsub.f32 %v808, %v809
    %v811 = vand.u32 %v810, 4294901760
    %812 = vmatpush1.msra.mxu0 %v811
    %813 = vmatprep.subr.mxu0 0.0
    %v814 = vand.u32 %v659, 4294901760
    %v815 = vsub.f32 %v659, %v814
    %v816 = vand.u32 %v815, 4294901760
    %v817 = vsub.f32 %v815, %v816
    %v818 = vand.u32 %v817, 4294901760
    %819 = vmatpush1.msra.mxu0 %v818
    %820 = vmatprep.subr.mxu0 0.0
    %v821 = vand.u32 %v660, 4294901760
    %v822 = vsub.f32 %v660, %v821
    %v823 = vand.u32 %v822, 4294901760
    %v824 = vsub.f32 %v822, %v823
    %v825 = vand.u32 %v824, 4294901760
    %826 = vmatpush1.msra.mxu0 %v825
    %827 = vmatprep.subr.mxu0 0.0
    %828 = vmatpush1.msra.mxu0 0.0
    %829 = vmatprep.subr.mxu0 0.0
    %830 = vmatpush1.msra.mxu0 0.0
    %831 = vmatprep.subr.mxu0 0.0
    %832 = vmatpush1.msra.mxu0 0.0
    %833 = vmatprep.subr.mxu0 0.0
    %834 = vmatpush1.msra.mxu0 0.0
    %835 = vmatprep.subr.mxu0 0.0
    %836 = vmatpush1.msra.mxu0 0.0
    %837 = vmatprep.subr.mxu0 0.0
    %838 = vmatpush1.msra.mxu0 0.0
    %839 = vmatprep.subr.mxu0 0.0
    %840 = vmatpush1.msra.mxu0 0.0
    %841 = vmatprep.subr.mxu0 0.0
    %842 = vmatpush1.msra.mxu0 0.0
    %843 = vmatprep.subr.mxu0 0.0
    %844 = vmatpush1.msra.mxu0 0.0
    %845 = vmatprep.subr.mxu0 0.0
    %846 = vmatpush1.msra.mxu0 0.0
    %847 = vmatprep.subr.mxu0 0.0
    %848 = vmatpush1.msra.mxu0 0.0
    %849 = vmatprep.subr.mxu0 0.0
    %850 = vmatpush1.msra.mxu0 0.0
    %851 = vmatprep.subr.mxu0 0.0
    %852 = vmatpush1.msra.mxu0 0.0
    %853 = vmatprep.subr.mxu0 0.0
    %854 = vmatpush1.msra.mxu0 0.0
    %855 = vmatprep.subr.mxu0 0.0
    %856 = vmatpush1.msra.mxu0 0.0
    %857 = vmatprep.subr.mxu0 0.0
    %858 = vmatpush1.msra.mxu0 0.0
    %859 = vmatprep.subr.mxu0 0.0
    %860 = vmatpush1.msra.mxu0 0.0
    %861 = vmatprep.subr.mxu0 0.0
    %862 = vmatpush1.msra.mxu0 0.0
    %863 = vmatprep.subr.mxu0 0.0
    %864 = vmatpush1.msra.mxu0 0.0
    %865 = vmatprep.subr.mxu0 0.0
    %866 = vmatpush1.msra.mxu0 0.0
    %867 = vmatprep.subr.mxu0 0.0
    %868 = vmatpush1.msra.mxu0 0.0
    %869 = vmatprep.subr.mxu0 0.0
    %870 = vmatpush1.msra.mxu0 0.0
    %871 = vmatprep.subr.mxu0 0.0
    %872 = vmatpush1.msra.mxu0 0.0
    %873 = vmatprep.subr.mxu0 0.0
    %874 = vmatpush1.msra.mxu0 0.0
    %875 = vmatprep.subr.mxu0 0.0
    %876 = vmatpush1.msra.mxu0 0.0
    %877 = vmatprep.subr.mxu0 0.0
    %878 = vmatpush1.msra.mxu0 0.0
    %879 = vmatprep.subr.mxu0 0.0
    %880 = vmatpush1.msra.mxu0 0.0
    %881 = vmatprep.subr.mxu0 0.0
    %882 = vmatpush1.msra.mxu0 0.0
    %883 = vmatprep.mubr.f32.mxu0 0.0
    %v884 = vand.u32 %v679, 4294901760
    %885 = vmatmul.mubr.f32.gmra.mrb[0].mxu0 %v884
    %v886 = vpop.f32.mrb[0].mxu0
    %v887 = vadd.f32 %v766, %v886
    %v888 = vpop.f32.mrb[0].mxu0
    %889 = vmatprep.mubr.f32.mxu0 0.0
    %v890 = vand.u32 %v682, 4294901760
    %891 = vmatmul.mubr.f32.gmra.mrb[0].mxu0 %v890
    %v892 = vpop.f32.mrb[0].mxu0
    %v893 = vadd.f32 %v776, %v892
    %v894 = vpop.f32.mrb[0].mxu0
    %895 = vmatprep.mubr.f32.mxu0 0.0
    %v896 = vand.u32 %v685, 4294901760
    %897 = vmatmul.mubr.f32.gmra.mrb[0].mxu0 %v896
    %v898 = vpop.f32.mrb[0].mxu0
    %v899 = vadd.f32 %v786, %v898
    %v900 = vpop.f32.mrb[0].mxu0
    %901 = vmatprep.mubr.f32.mxu0 0.0
    %v902 = vand.u32 %v688, 4294901760
    %903 = vmatmul.mubr.f32.gmra.mrb[0].mxu0 %v902
    %v904 = vpop.f32.mrb[0].mxu0
    %v905 = vadd.f32 %v796, %v904
    %v906 = vpop.f32.mrb[0].mxu0
    %907 = vdwg.mxu0
    %908 = vmatprep.subr.mxu0 0.0
    %v909 = vand.u32 %v657, 4294901760
    %v910 = vsub.f32 %v657, %v909
    %911 = vmatpush1.msra.mxu0 %v910
    %912 = vmatprep.subr.mxu0 0.0
    %v913 = vand.u32 %v658, 4294901760
    %v914 = vsub.f32 %v658, %v913
    %915 = vmatpush1.msra.mxu0 %v914
    %916 = vmatprep.subr.mxu0 0.0
    %v917 = vand.u32 %v659, 4294901760
    %v918 = vsub.f32 %v659, %v917
    %919 = vmatpush1.msra.mxu0 %v918
    %920 = vmatprep.subr.mxu0 0.0
    %v921 = vand.u32 %v660, 4294901760
    %v922 = vsub.f32 %v660, %v921
    %923 = vmatpush1.msra.mxu0 %v922
    %924 = vmatprep.subr.mxu0 0.0
    %925 = vmatpush1.msra.mxu0 0.0
    %926 = vmatprep.subr.mxu0 0.0
    %927 = vmatpush1.msra.mxu0 0.0
    %928 = vmatprep.subr.mxu0 0.0
    %929 = vmatpush1.msra.mxu0 0.0
    %930 = vmatprep.subr.mxu0 0.0
    %931 = vmatpush1.msra.mxu0 0.0
    %932 = vmatprep.subr.mxu0 0.0
    %933 = vmatpush1.msra.mxu0 0.0
    %934 = vmatprep.subr.mxu0 0.0
    %935 = vmatpush1.msra.mxu0 0.0
    %936 = vmatprep.subr.mxu0 0.0
    %937 = vmatpush1.msra.mxu0 0.0
    %938 = vmatprep.subr.mxu0 0.0
    %939 = vmatpush1.msra.mxu0 0.0
    %940 = vmatprep.subr.mxu0 0.0
    %941 = vmatpush1.msra.mxu0 0.0
    %942 = vmatprep.subr.mxu0 0.0
    %943 = vmatpush1.msra.mxu0 0.0
    %944 = vmatprep.subr.mxu0 0.0
    %945 = vmatpush1.msra.mxu0 0.0
    %946 = vmatprep.subr.mxu0 0.0
    %947 = vmatpush1.msra.mxu0 0.0
    %948 = vmatprep.subr.mxu0 0.0
    %949 = vmatpush1.msra.mxu0 0.0
    %950 = vmatprep.subr.mxu0 0.0
    %951 = vmatpush1.msra.mxu0 0.0
    %952 = vmatprep.subr.mxu0 0.0
    %953 = vmatpush1.msra.mxu0 0.0
    %954 = vmatprep.subr.mxu0 0.0
    %955 = vmatpush1.msra.mxu0 0.0
    %956 = vmatprep.subr.mxu0 0.0
    %957 = vmatpush1.msra.mxu0 0.0
    %958 = vmatprep.subr.mxu0 0.0
    %959 = vmatpush1.msra.mxu0 0.0
    %960 = vmatprep.subr.mxu0 0.0
    %961 = vmatpush1.msra.mxu0 0.0
    %962 = vmatprep.subr.mxu0 0.0
    %963 = vmatpush1.msra.mxu0 0.0
    %964 = vmatprep.subr.mxu0 0.0
    %965 = vmatpush1.msra.mxu0 0.0
    %966 = vmatprep.subr.mxu0 0.0
    %967 = vmatpush1.msra.mxu0 0.0
    %968 = vmatprep.subr.mxu0 0.0
    %969 = vmatpush1.msra.mxu0 0.0
    %970 = vmatprep.subr.mxu0 0.0
    %971 = vmatpush1.msra.mxu0 0.0
    %972 = vmatprep.subr.mxu0 0.0
    %973 = vmatpush1.msra.mxu0 0.0
    %974 = vmatprep.subr.mxu0 0.0
    %975 = vmatpush1.msra.mxu0 0.0
    %976 = vmatprep.subr.mxu0 0.0
    %977 = vmatpush1.msra.mxu0 0.0
    %978 = vmatprep.subr.mxu0 0.0
    %979 = vmatpush1.msra.mxu0 0.0
    %980 = vmatprep.mubr.f32.mxu0 0.0
    %v981 = vand.u32 %v679, 4294901760
    %v982 = vsub.f32 %v679, %v981
    %983 = vmatmul.mubr.f32.gmra.mrb[0].mxu0 %v982
    %v984 = vpop.f32.mrb[0].mxu0
    %v985 = vadd.f32 %v887, %v984
    %v986 = vpop.f32.mrb[0].mxu0
    %987 = vmatprep.mubr.f32.mxu0 0.0
    %v988 = vand.u32 %v682, 4294901760
    %v989 = vsub.f32 %v682, %v988
    %990 = vmatmul.mubr.f32.gmra.mrb[0].mxu0 %v989
    %v991 = vpop.f32.mrb[0].mxu0
    %v992 = vadd.f32 %v893, %v991
    %v993 = vpop.f32.mrb[0].mxu0
    %994 = vmatprep.mubr.f32.mxu0 0.0
    %v995 = vand.u32 %v685, 4294901760
    %v996 = vsub.f32 %v685, %v995
    %997 = vmatmul.mubr.f32.gmra.mrb[0].mxu0 %v996
    %v998 = vpop.f32.mrb[0].mxu0
    %v999 = vadd.f32 %v899, %v998
    %v1000 = vpop.f32.mrb[0].mxu0
    %1001 = vmatprep.mubr.f32.mxu0 0.0
    %v1002 = vand.u32 %v688, 4294901760
    %v1003 = vsub.f32 %v688, %v1002
    %1004 = vmatmul.mubr.f32.gmra.mrb[0].mxu0 %v1003
    %v1005 = vpop.f32.mrb[0].mxu0
    %v1006 = vadd.f32 %v905, %v1005
    %v1007 = vpop.f32.mrb[0].mxu0
    %1008 = vdwg.mxu0
    %1009 = vmatprep.subr.mxu0 0.0
    %v1010 = vand.u32 %v657, 4294901760
    %1011 = vmatpush1.msra.mxu0 %v1010
    %1012 = vmatprep.subr.mxu0 0.0
    %v1013 = vand.u32 %v658, 4294901760
    %1014 = vmatpush1.msra.mxu0 %v1013
    %1015 = vmatprep.subr.mxu0 0.0
    %v1016 = vand.u32 %v659, 4294901760
    %1017 = vmatpush1.msra.mxu0 %v1016
    %1018 = vmatprep.subr.mxu0 0.0
    %v1019 = vand.u32 %v660, 4294901760
    %1020 = vmatpush1.msra.mxu0 %v1019
    %1021 = vmatprep.subr.mxu0 0.0
    %1022 = vmatpush1.msra.mxu0 0.0
    %1023 = vmatprep.subr.mxu0 0.0
    %1024 = vmatpush1.msra.mxu0 0.0
    %1025 = vmatprep.subr.mxu0 0.0
    %1026 = vmatpush1.msra.mxu0 0.0
    %1027 = vmatprep.subr.mxu0 0.0
    %1028 = vmatpush1.msra.mxu0 0.0
    %1029 = vmatprep.subr.mxu0 0.0
    %1030 = vmatpush1.msra.mxu0 0.0
    %1031 = vmatprep.subr.mxu0 0.0
    %1032 = vmatpush1.msra.mxu0 0.0
    %1033 = vmatprep.subr.mxu0 0.0
    %1034 = vmatpush1.msra.mxu0 0.0
    %1035 = vmatprep.subr.mxu0 0.0
    %1036 = vmatpush1.msra.mxu0 0.0
    %1037 = vmatprep.subr.mxu0 0.0
    %1038 = vmatpush1.msra.mxu0 0.0
    %1039 = vmatprep.subr.mxu0 0.0
    %1040 = vmatpush1.msra.mxu0 0.0
    %1041 = vmatprep.subr.mxu0 0.0
    %1042 = vmatpush1.msra.mxu0 0.0
    %1043 = vmatprep.subr.mxu0 0.0
    %1044 = vmatpush1.msra.mxu0 0.0
    %1045 = vmatprep.subr.mxu0 0.0
    %1046 = vmatpush1.msra.mxu0 0.0
    %1047 = vmatprep.subr.mxu0 0.0
    %1048 = vmatpush1.msra.mxu0 0.0
    %1049 = vmatprep.subr.mxu0 0.0
    %1050 = vmatpush1.msra.mxu0 0.0
    %1051 = vmatprep.subr.mxu0 0.0
    %1052 = vmatpush1.msra.mxu0 0.0
    %1053 = vmatprep.subr.mxu0 0.0
    %1054 = vmatpush1.msra.mxu0 0.0
    %1055 = vmatprep.subr.mxu0 0.0
    %1056 = vmatpush1.msra.mxu0 0.0
    %1057 = vmatprep.subr.mxu0 0.0
    %1058 = vmatpush1.msra.mxu0 0.0
    %1059 = vmatprep.subr.mxu0 0.0
    %1060 = vmatpush1.msra.mxu0 0.0
    %1061 = vmatprep.subr.mxu0 0.0
    %1062 = vmatpush1.msra.mxu0 0.0
    %1063 = vmatprep.subr.mxu0 0.0
    %1064 = vmatpush1.msra.mxu0 0.0
    %1065 = vmatprep.subr.mxu0 0.0
    %1066 = vmatpush1.msra.mxu0 0.0
    %1067 = vmatprep.subr.mxu0 0.0
    %1068 = vmatpush1.msra.mxu0 0.0
    %1069 = vmatprep.subr.mxu0 0.0
    %1070 = vmatpush1.msra.mxu0 0.0
    %1071 = vmatprep.subr.mxu0 0.0
    %1072 = vmatpush1.msra.mxu0 0.0
    %1073 = vmatprep.subr.mxu0 0.0
    %1074 = vmatpush1.msra.mxu0 0.0
    %1075 = vmatprep.subr.mxu0 0.0
    %1076 = vmatpush1.msra.mxu0 0.0
    %1077 = vmatprep.mubr.f32.mxu0 0.0
    %v1078 = vand.u32 %v679, 4294901760
    %v1079 = vsub.f32 %v679, %v1078
    %v1080 = vand.u32 %v1079, 4294901760
    %1081 = vmatmul.mubr.f32.gmra.mrb[0].mxu0 %v1080
    %v1082 = vpop.f32.mrb[0].mxu0
    %v1083 = vadd.f32 %v985, %v1082
    %v1084 = vpop.f32.mrb[0].mxu0
    %1085 = vmatprep.mubr.f32.mxu0 0.0
    %v1086 = vand.u32 %v682, 4294901760
    %v1087 = vsub.f32 %v682, %v1086
    %v1088 = vand.u32 %v1087, 4294901760
    %1089 = vmatmul.mubr.f32.gmra.mrb[0].mxu0 %v1088
    %v1090 = vpop.f32.mrb[0].mxu0
    %v1091 = vadd.f32 %v992, %v1090
    %v1092 = vpop.f32.mrb[0].mxu0
    %1093 = vmatprep.mubr.f32.mxu0 0.0
    %v1094 = vand.u32 %v685, 4294901760
    %v1095 = vsub.f32 %v685, %v1094
    %v1096 = vand.u32 %v1095, 4294901760
    %1097 = vmatmul.mubr.f32.gmra.mrb[0].mxu0 %v1096
    %v1098 = vpop.f32.mrb[0].mxu0
    %v1099 = vadd.f32 %v999, %v1098
    %v1100 = vpop.f32.mrb[0].mxu0
    %1101 = vmatprep.mubr.f32.mxu0 0.0
    %v1102 = vand.u32 %v688, 4294901760
    %v1103 = vsub.f32 %v688, %v1102
    %v1104 = vand.u32 %v1103, 4294901760
    %1105 = vmatmul.mubr.f32.gmra.mrb[0].mxu0 %v1104
    %v1106 = vpop.f32.mrb[0].mxu0
    %v1107 = vadd.f32 %v1006, %v1106
    %v1108 = vpop.f32.mrb[0].mxu0
    %1109 = vdwg.mxu0
    %1110 = vmatprep.subr.mxu0 0.0
    %v1111 = vand.u32 %v657, 4294901760
    %v1112 = vsub.f32 %v657, %v1111
    %v1113 = vand.u32 %v1112, 4294901760
    %1114 = vmatpush1.msra.mxu0 %v1113
    %1115 = vmatprep.subr.mxu0 0.0
    %v1116 = vand.u32 %v658, 4294901760
    %v1117 = vsub.f32 %v658, %v1116
    %v1118 = vand.u32 %v1117, 4294901760
    %1119 = vmatpush1.msra.mxu0 %v1118
    %1120 = vmatprep.subr.mxu0 0.0
    %v1121 = vand.u32 %v659, 4294901760
    %v1122 = vsub.f32 %v659, %v1121
    %v1123 = vand.u32 %v1122, 4294901760
    %1124 = vmatpush1.msra.mxu0 %v1123
    %1125 = vmatprep.subr.mxu0 0.0
    %v1126 = vand.u32 %v660, 4294901760
    %v1127 = vsub.f32 %v660, %v1126
    %v1128 = vand.u32 %v1127, 4294901760
    %1129 = vmatpush1.msra.mxu0 %v1128
    %1130 = vmatprep.subr.mxu0 0.0
    %1131 = vmatpush1.msra.mxu0 0.0
    %1132 = vmatprep.subr.mxu0 0.0
    %1133 = vmatpush1.msra.mxu0 0.0
    %1134 = vmatprep.subr.mxu0 0.0
    %1135 = vmatpush1.msra.mxu0 0.0
    %1136 = vmatprep.subr.mxu0 0.0
    %1137 = vmatpush1.msra.mxu0 0.0
    %1138 = vmatprep.subr.mxu0 0.0
    %1139 = vmatpush1.msra.mxu0 0.0
    %1140 = vmatprep.subr.mxu0 0.0
    %1141 = vmatpush1.msra.mxu0 0.0
    %1142 = vmatprep.subr.mxu0 0.0
    %1143 = vmatpush1.msra.mxu0 0.0
    %1144 = vmatprep.subr.mxu0 0.0
    %1145 = vmatpush1.msra.mxu0 0.0
    %1146 = vmatprep.subr.mxu0 0.0
    %1147 = vmatpush1.msra.mxu0 0.0
    %1148 = vmatprep.subr.mxu0 0.0
    %1149 = vmatpush1.msra.mxu0 0.0
    %1150 = vmatprep.subr.mxu0 0.0
    %1151 = vmatpush1.msra.mxu0 0.0
    %1152 = vmatprep.subr.mxu0 0.0
    %1153 = vmatpush1.msra.mxu0 0.0
    %1154 = vmatprep.subr.mxu0 0.0
    %1155 = vmatpush1.msra.mxu0 0.0
    %1156 = vmatprep.subr.mxu0 0.0
    %1157 = vmatpush1.msra.mxu0 0.0
    %1158 = vmatprep.subr.mxu0 0.0
    %1159 = vmatpush1.msra.mxu0 0.0
    %1160 = vmatprep.subr.mxu0 0.0
    %1161 = vmatpush1.msra.mxu0 0.0
    %1162 = vmatprep.subr.mxu0 0.0
    %1163 = vmatpush1.msra.mxu0 0.0
    %1164 = vmatprep.subr.mxu0 0.0
    %1165 = vmatpush1.msra.mxu0 0.0
    %1166 = vmatprep.subr.mxu0 0.0
    %1167 = vmatpush1.msra.mxu0 0.0
    %1168 = vmatprep.subr.mxu0 0.0
    %1169 = vmatpush1.msra.mxu0 0.0
    %1170 = vmatprep.subr.mxu0 0.0
    %1171 = vmatpush1.msra.mxu0 0.0
    %1172 = vmatprep.subr.mxu0 0.0
    %1173 = vmatpush1.msra.mxu0 0.0
    %1174 = vmatprep.subr.mxu0 0.0
    %1175 = vmatpush1.msra.mxu0 0.0
    %1176 = vmatprep.subr.mxu0 0.0
    %1177 = vmatpush1.msra.mxu0 0.0
    %1178 = vmatprep.subr.mxu0 0.0
    %1179 = vmatpush1.msra.mxu0 0.0
    %1180 = vmatprep.subr.mxu0 0.0
    %1181 = vmatpush1.msra.mxu0 0.0
    %1182 = vmatprep.subr.mxu0 0.0
    %1183 = vmatpush1.msra.mxu0 0.0
    %1184 = vmatprep.subr.mxu0 0.0
    %1185 = vmatpush1.msra.mxu0 0.0
    %1186 = vmatprep.mubr.f32.mxu0 0.0
    %v1187 = vand.u32 %v679, 4294901760
    %1188 = vmatmul.mubr.f32.gmra.mrb[0].mxu0 %v1187
    %v1189 = vpop.f32.mrb[0].mxu0
    %v1190 = vadd.f32 %v1083, %v1189
    %v1191 = vpop.f32.mrb[0].mxu0
    %1192 = vmatprep.mubr.f32.mxu0 0.0
    %v1193 = vand.u32 %v682, 4294901760
    %1194 = vmatmul.mubr.f32.gmra.mrb[0].mxu0 %v1193
    %v1195 = vpop.f32.mrb[0].mxu0
    %v1196 = vadd.f32 %v1091, %v1195
    %v1197 = vpop.f32.mrb[0].mxu0
    %1198 = vmatprep.mubr.f32.mxu0 0.0
    %v1199 = vand.u32 %v685, 4294901760
    %1200 = vmatmul.mubr.f32.gmra.mrb[0].mxu0 %v1199
    %v1201 = vpop.f32.mrb[0].mxu0
    %v1202 = vadd.f32 %v1099, %v1201
    %v1203 = vpop.f32.mrb[0].mxu0
    %1204 = vmatprep.mubr.f32.mxu0 0.0
    %v1205 = vand.u32 %v688, 4294901760
    %1206 = vmatmul.mubr.f32.gmra.mrb[0].mxu0 %v1205
    %v1207 = vpop.f32.mrb[0].mxu0
    %v1208 = vadd.f32 %v1107, %v1207
    %v1209 = vpop.f32.mrb[0].mxu0
    %1210 = vdwg.mxu0
    %1211 = vmatprep.subr.mxu0 0.0
    %v1212 = vand.u32 %v657, 4294901760
    %1213 = vmatpush1.msra.mxu0 %v1212
    %1214 = vmatprep.subr.mxu0 0.0
    %v1215 = vand.u32 %v658, 4294901760
    %1216 = vmatpush1.msra.mxu0 %v1215
    %1217 = vmatprep.subr.mxu0 0.0
    %v1218 = vand.u32 %v659, 4294901760
    %1219 = vmatpush1.msra.mxu0 %v1218
    %1220 = vmatprep.subr.mxu0 0.0
    %v1221 = vand.u32 %v660, 4294901760
    %1222 = vmatpush1.msra.mxu0 %v1221
    %1223 = vmatprep.subr.mxu0 0.0
    %1224 = vmatpush1.msra.mxu0 0.0
    %1225 = vmatprep.subr.mxu0 0.0
    %1226 = vmatpush1.msra.mxu0 0.0
    %1227 = vmatprep.subr.mxu0 0.0
    %1228 = vmatpush1.msra.mxu0 0.0
    %1229 = vmatprep.subr.mxu0 0.0
    %1230 = vmatpush1.msra.mxu0 0.0
    %1231 = vmatprep.subr.mxu0 0.0
    %1232 = vmatpush1.msra.mxu0 0.0
    %1233 = vmatprep.subr.mxu0 0.0
    %1234 = vmatpush1.msra.mxu0 0.0
    %1235 = vmatprep.subr.mxu0 0.0
    %1236 = vmatpush1.msra.mxu0 0.0
    %1237 = vmatprep.subr.mxu0 0.0
    %1238 = vmatpush1.msra.mxu0 0.0
    %1239 = vmatprep.subr.mxu0 0.0
    %1240 = vmatpush1.msra.mxu0 0.0
    %1241 = vmatprep.subr.mxu0 0.0
    %1242 = vmatpush1.msra.mxu0 0.0
    %1243 = vmatprep.subr.mxu0 0.0
    %1244 = vmatpush1.msra.mxu0 0.0
    %1245 = vmatprep.subr.mxu0 0.0
    %1246 = vmatpush1.msra.mxu0 0.0
    %1247 = vmatprep.subr.mxu0 0.0
    %1248 = vmatpush1.msra.mxu0 0.0
    %1249 = vmatprep.subr.mxu0 0.0
    %1250 = vmatpush1.msra.mxu0 0.0
    %1251 = vmatprep.subr.mxu0 0.0
    %1252 = vmatpush1.msra.mxu0 0.0
    %1253 = vmatprep.subr.mxu0 0.0
    %1254 = vmatpush1.msra.mxu0 0.0
    %1255 = vmatprep.subr.mxu0 0.0
    %1256 = vmatpush1.msra.mxu0 0.0
    %1257 = vmatprep.subr.mxu0 0.0
    %1258 = vmatpush1.msra.mxu0 0.0
    %1259 = vmatprep.subr.mxu0 0.0
    %1260 = vmatpush1.msra.mxu0 0.0
    %1261 = vmatprep.subr.mxu0 0.0
    %1262 = vmatpush1.msra.mxu0 0.0
    %1263 = vmatprep.subr.mxu0 0.0
    %1264 = vmatpush1.msra.mxu0 0.0
    %1265 = vmatprep.subr.mxu0 0.0
    %1266 = vmatpush1.msra.mxu0 0.0
    %1267 = vmatprep.subr.mxu0 0.0
    %1268 = vmatpush1.msra.mxu0 0.0
    %1269 = vmatprep.subr.mxu0 0.0
    %1270 = vmatpush1.msra.mxu0 0.0
    %1271 = vmatprep.subr.mxu0 0.0
    %1272 = vmatpush1.msra.mxu0 0.0
    %1273 = vmatprep.subr.mxu0 0.0
    %1274 = vmatpush1.msra.mxu0 0.0
    %1275 = vmatprep.subr.mxu0 0.0
    %1276 = vmatpush1.msra.mxu0 0.0
    %1277 = vmatprep.subr.mxu0 0.0
    %1278 = vmatpush1.msra.mxu0 0.0
    %1279 = vmatprep.mubr.f32.mxu0 0.0
    %v1280 = vand.u32 %v679, 4294901760
    %1281 = vmatmul.mubr.f32.gmra.mrb[0].mxu0 %v1280
    %v1282 = vpop.f32.mrb[0].mxu0
    %v1283 = vadd.f32 %v1190, %v1282
    %v1284 = vpop.f32.mrb[0].mxu0
    %1285 = vmatprep.mubr.f32.mxu0 0.0
    %v1286 = vand.u32 %v682, 4294901760
    %1287 = vmatmul.mubr.f32.gmra.mrb[0].mxu0 %v1286
    %v1288 = vpop.f32.mrb[0].mxu0
    %v1289 = vadd.f32 %v1196, %v1288
    %v1290 = vpop.f32.mrb[0].mxu0
    %1291 = vmatprep.mubr.f32.mxu0 0.0
    %v1292 = vand.u32 %v685, 4294901760
    %1293 = vmatmul.mubr.f32.gmra.mrb[0].mxu0 %v1292
    %v1294 = vpop.f32.mrb[0].mxu0
    %v1295 = vadd.f32 %v1202, %v1294
    %v1296 = vpop.f32.mrb[0].mxu0
    %1297 = vmatprep.mubr.f32.mxu0 0.0
    %v1298 = vand.u32 %v688, 4294901760
    %1299 = vmatmul.mubr.f32.gmra.mrb[0].mxu0 %v1298
    %v1300 = vpop.f32.mrb[0].mxu0
    %v1301 = vadd.f32 %v1208, %v1300
    %v1302 = vpop.f32.mrb[0].mxu0
    %1303 = vdwg.mxu0
    %v1304 = vmax.f32 %v1283, 0.0
    %v1305 = vmax.f32 %v1289, 0.0
    %v1306 = vmax.f32 %v1295, 0.0
    %v1307 = vmax.f32 %v1301, 0.0
    %1308 = vset.pattern.permute.xlu0 2
    %1309 = vperm.xlu0 %1308, %v41
    %v1310 = vpop.permute.xlu0 %1309
    %1312 = vset.pattern.permute.xlu0 2
    %1313 = vperm.xlu0 %1312, %v42
    %v1314 = vpop.permute.xlu0 %1313
    %1316 = vset.pattern.permute.xlu0 2
    %1317 = vperm.xlu0 %1316, %v43
    %v1318 = vpop.permute.xlu0 %1317
    %1320 = vset.pattern.permute.xlu0 2
    %1321 = vperm.xlu0 %1320, %v44
    %v1322 = vpop.permute.xlu0 %1321
    %v1324 = vmul.f32 %v1304, %v1310
    %v1325 = vmul.f32 %v1305, %v1314
    %v1326 = vmul.f32 %v1306, %v1318
    %v1327 = vmul.f32 %v1307, %v1322
    %vm1328 = vcmask 64512
    %v1329 = vsel %vm1328, %v1324, 0.0
    %v1330 = vsel %vm1328, %v1325, 0.0
    %v1331 = vadd.f32 %v1329, %v1330
    %v1332 = vsel %vm1328, %v1326, 0.0
    %v1333 = vadd.f32 %v1331, %v1332
    %v1334 = vsel %vm1328, %v1327, 0.0
    %v1335 = vadd.f32 %v1333, %v1334
    %v1336 = vrot.slane %v1335, 4
    %v1337 = vadd.f32 %v1335, %v1336
    %v1338 = vrot.slane %v1337, 2
    %v1339 = vadd.f32 %v1337, %v1338
    %v1340 = vrot.slane %v1339, 1
    %v1341 = vadd.f32 %v1339, %v1340
    %1343 = vset.pattern.permute.xlu0 3
    %1344 = vperm.xlu0 %1343, %v45
    %v1345 = vpop.permute.xlu0 %1344
    %v1347 = vadd.f32 %v1341, %v1345
    %vm1348 = vcmask 57344
    %1349 = vst.msk [vmem:[#allocation5] sm:$0x1] %vm1348, %v1347
    // Predicated region
    $region22: #{tpu_custom_call.1} parent=1 // pred_check
      _
    $region23: #{tpu_custom_call.1} parent=1 // pred_check_branch
      %1351 = sbr.rel (0) target = $region25
    $region24: #{tpu_custom_call.1} parent=1 // pred_region
      %s1353 = ssub.s32 16, 16
      %1354 = vsyncadd [#allocation4], %s1353
      %s1356 = sshll.u32 [#allocation5], 4
      %s1357 = int_to_ptr.vmem [resolvable:$true] %s1356
      %1359 = dma.vmem_to_hbm [thread:$0]  %s1357, 16, %s4, [#allocation4]
    $region25: #{tpu_custom_call.1} parent=1 // pred_fallthru
      _
    // Predicated region
    $region26: #{tpu_custom_call.1} parent=1 // pred_check
      _
    $region27: #{tpu_custom_call.1} parent=1 // pred_check_branch
      %1361 = sbr.rel (0) target = $region29
    $region28: #{tpu_custom_call.1} parent=1 // pred_region
      %1362 = dma.done [#allocation4], 16
    $region29: #{tpu_custom_call.1} parent=1 // pred_fallthru
      _
    %1363 = vsyncpa [#allocation3], 1
    %1364 = vsyncpa [#allocation4], 1

</llo_original>
